<compile_context>
chip_gen: v5e
topology: v5e:2x2
jax: 0.10.0
libtpu: 0.0.40
codegen_flags: <defaults>
</compile_context>

<pallas_src>
import math

import jax
import jax.numpy as jnp
from jax.experimental import pallas as pl
from jax.experimental.pallas import tpu as pltpu


def pos_enc_kernel(x_ref, pe_ref, o_ref):
    # x_ref: (tile_s, B, D); pe_ref: (tile_s, 1, D) -> broadcast add over batch.
    o_ref[...] = (x_ref[...] + pe_ref[...]).astype(o_ref.dtype)
    # TODO(synk): training-mode dropout (p=0.1) could be fused here with
    # pltpu.prng_seed + pltpu.prng_random_bits (mask, scale by 1/(1-p));
    # this kernel implements the eval-mode forward (dropout == identity).


def _choose_tile_s(S, B, D, itemsize,
                   target_tile_bytes=2 << 20,     # ~2 MiB slabs: long DMA bursts,
                                                  # double-buffered in+out stays
                                                  # well under v5e/v6e/v7x VMEM.
                   single_block_below=1 << 20):
    """Size tiles by bytes, not rows (per-grid-step overhead ~0.35 us)."""
    bytes_per_row = B * D * itemsize
    total_bytes = S * bytes_per_row
    if total_bytes <= single_block_below:
        # Tiny problem: single block; grid-step overhead would exceed HBM time.
        return S
    tile_s = max(1, min(S, target_tile_bytes // bytes_per_row))
    # Keep >= 2 grid steps so v7x can shard the copy+add over its 2 TensorCores.
    tile_s = min(tile_s, pl.cdiv(S, 2))
    return int(tile_s)


def positional_encoding(x, pe, *, tile_s=None):
    """out = x + pe[:S] for x:[S,B,D], pe:[max_len,1,D] with max_len >= S.

    Equivalent to PositionalEncoding.forward in eval mode (dropout identity).
    """
    S, B, D = x.shape
    assert pe.ndim == 3 and pe.shape[1] == 1 and pe.shape[2] == D, "pe must be [max_len, 1, D]"
    assert pe.shape[0] >= S, "max_len must cover the sequence length"

    pe_s = pe[:S].astype(x.dtype)                       # [S, 1, D]

    if tile_s is None:
        tile_s = _choose_tile_s(S, B, D, jnp.dtype(x.dtype).itemsize)
    tile_s = int(min(max(1, tile_s), S))
    grid = (pl.cdiv(S, tile_s),)                        # partial last block OK

    return pl.pallas_call(
        pos_enc_kernel,
        out_shape=jax.ShapeDtypeStruct((S, B, D), x.dtype),
        grid_spec=pltpu.PrefetchScalarGridSpec(
            num_scalar_prefetch=0,
            grid=grid,
            in_specs=[
                pl.BlockSpec((tile_s, B, D), lambda i: (i, 0, 0)),
                pl.BlockSpec((tile_s, 1, D), lambda i: (i, 0, 0)),
            ],
            out_specs=pl.BlockSpec((tile_s, B, D), lambda i: (i, 0, 0)),
        ),
        compiler_params=pltpu.CompilerParams(
            dimension_semantics=("parallel",)),
    )(x, pe_s)


def make_pe(max_len, d_model, dtype=jnp.float32):
    """Sinusoidal positional-encoding buffer, shape [max_len, 1, d_model]."""
    assert d_model % 2 == 0, (
        "sinusoidal PE requires even d_model (the PyTorch reference has the "
        "same limitation)")
    position = jnp.arange(max_len, dtype=jnp.float32)[:, None]           # [max_len, 1]
    div_term = jnp.exp(
        jnp.arange(0, d_model, 2, dtype=jnp.float32)
        * (-math.log(10000.0) / d_model))                                # [d_model/2]
    pe = jnp.zeros((max_len, d_model), dtype=jnp.float32)
    pe = pe.at[:, 0::2].set(jnp.sin(position * div_term))
    pe = pe.at[:, 1::2].set(jnp.cos(position * div_term))
    return pe[:, None, :].astype(dtype)                                  # [max_len, 1, d_model]


if __name__ == "__main__":
    # The module's canonical [seq, batch, d_model] = [35, 20, 200] (still small:
    # ~560 KB f32). S=35 exercises the non-divisible / partial-block path.
    S, B, D = 35, 20, 200
    MAX_LEN = 64

    key = jax.random.PRNGKey(0)
    x = jax.random.normal(key, (S, B, D), dtype=jnp.float32)
    pe = make_pe(MAX_LEN, D, dtype=jnp.float32)

    # Pure-JAX reference: x + pe[:S] (dropout identity in eval mode).
    ref = x + pe[:S]

    # 1) Auto tile sizing: whole problem < 1 MiB -> single block, grid=(1,).
    out = jax.block_until_ready(positional_encoding(x, pe))
    assert out.shape == (S, B, D)
    assert jnp.allclose(out, ref, atol=1e-6, rtol=1e-6), "mismatch (auto tile)"

    # 2) Forced small tile -> grid = cdiv(35, 8) = 5 with a partial last block.
    out_tiled = jax.block_until_ready(positional_encoding(x, pe, tile_s=8))
    assert jnp.allclose(out_tiled, ref, atol=1e-6, rtol=1e-6), "mismatch (partial block)"

    # 3) bf16 path (halves HBM traffic for this bandwidth-bound op).
    x16 = x.astype(jnp.bfloat16)
    pe16 = pe.astype(jnp.bfloat16)
    out16 = jax.block_until_ready(positional_encoding(x16, pe16))
    ref16 = x16.astype(jnp.float32) + pe16[:S].astype(jnp.float32)
    assert jnp.allclose(out16.astype(jnp.float32), ref16, atol=2e-2, rtol=2e-2), \
        "mismatch (bf16)"

    print("KERNEL_OK")
</pallas_src>

<mosaic_0001>
module attributes {stable_mosaic.version = 11 : i64} {
  func.func @pos_enc_kernel(%arg0: i32, %arg1: memref<35x20x200xf32, #tpu.memory_space<vmem>>, %arg2: memref<35x1x200xf32, #tpu.memory_space<vmem>>, %arg3: memref<35x20x200xf32, #tpu.memory_space<vmem>>) attributes {dimension_semantics = [#tpu.dimension_semantics<parallel>], iteration_bounds = array<i64: 1>, scalar_prefetch = 0 : i64, scratch_operands = 0 : i64, tpu.core_type = #tpu.core_type<tc>, window_params = [{transform_indices = @transform_0, window_bounds = array<i64: 35, 20, 200>}, {transform_indices = @transform_1, window_bounds = array<i64: 35, 1, 200>}, {transform_indices = @transform_2, window_bounds = array<i64: 35, 20, 200>}]} {
    %c0 = arith.constant 0 : index
    %c0_0 = arith.constant 0 : index
    %c0_1 = arith.constant 0 : index
    %0 = vector.load %arg1[%c0, %c0_0, %c0_1] : memref<35x20x200xf32, #tpu.memory_space<vmem>>, vector<35x20x200xf32>
    %c0_2 = arith.constant 0 : index
    %c0_3 = arith.constant 0 : index
    %c0_4 = arith.constant 0 : index
    %1 = vector.load %arg2[%c0_2, %c0_3, %c0_4] : memref<35x1x200xf32, #tpu.memory_space<vmem>>, vector<35x1x200xf32>
    %2 = vector.broadcast %1 : vector<35x1x200xf32> to vector<35x20x200xf32>
    %3 = arith.addf %0, %2 : vector<35x20x200xf32>
    %c0_5 = arith.constant 0 : index
    %c0_6 = arith.constant 0 : index
    %c0_7 = arith.constant 0 : index
    %4 = vector.load %arg3[%c0_5, %c0_6, %c0_7] : memref<35x20x200xf32, #tpu.memory_space<vmem>>, vector<35x20x200xf32>
    tpu.vector_store %arg3[%c0_5, %c0_6, %c0_7], %3 {strides = array<i32>} : memref<35x20x200xf32, #tpu.memory_space<vmem>>, vector<35x20x200xf32>,
    return
  }
  func.func @transform_0(%arg0: i32) -> (i32, i32, i32) {
    %c0_i32 = arith.constant 0 : i32
    %c0_i32_0 = arith.constant 0 : i32
    %c0_i32_1 = arith.constant 0 : i32
    return %arg0, %c0_i32, %c0_i32_0 : i32, i32, i32
  }
  func.func @transform_1(%arg0: i32) -> (i32, i32, i32) {
    %c0_i32 = arith.constant 0 : i32
    %c0_i32_0 = arith.constant 0 : i32
    %c0_i32_1 = arith.constant 0 : i32
    return %arg0, %c0_i32, %c0_i32_0 : i32, i32, i32
  }
  func.func @transform_2(%arg0: i32) -> (i32, i32, i32) {
    %c0_i32 = arith.constant 0 : i32
    %c0_i32_0 = arith.constant 0 : i32
    %c0_i32_1 = arith.constant 0 : i32
    return %arg0, %c0_i32, %c0_i32_0 : i32, i32, i32
  }
}

</mosaic_0001>

<llo_original>
// kernel: tpu_custom_call.1
$region0: #{tpu_custom_call.1}
  #allocation0 [shape = 'u32[]', space=smem, size = 0x4, offset = 0x4, fixed_abs, tag = 'smem constant byte address 0x4 - core index']
  #allocation1 [shape = 'u32[72,128]{1,0:T(1,128)}', space=vmem, size = 0x9000, scoped, tag = 'internal scratch']
  %s0 = inlined_call_operand.vmem [shape: f32[35,20,200], index: 0, kind: input, shape index: {}]
  %s1 = inlined_call_operand.vmem [shape: f32[35,1,200], index: 1, kind: input, shape index: {}]
  %s2 = inlined_call_operand.vmem [shape: f32[35,20,200], index: 2, kind: output, shape index: {}]
  %s3 = sld [smem:[#allocation0]]
  $region18: #{tpu_custom_call.1} parent=0
    _
  %s5 = ssub.s32 1, %s3
  %s6 = scalar_select 0, %s5, %s3
  // Predicated region
  $region2: #{tpu_custom_call.1} parent=0 // pred_check
    _
  $region3: #{tpu_custom_call.1} parent=0 // pred_check_branch
    %8 = sbr.rel (0) target = $region5
  $region4: #{tpu_custom_call.1} parent=0 // pred_region
    _
  $region5: #{tpu_custom_call.1} parent=0 // pred_fallthru
    _
  // Predicated region
  $region6: #{tpu_custom_call.1} parent=0 // pred_check
    _
  $region7: #{tpu_custom_call.1} parent=0 // pred_check_branch
    %10 = sbr.rel (0) target = $region9
  $region8: #{tpu_custom_call.1} parent=0 // pred_region
    _
  $region9: #{tpu_custom_call.1} parent=0 // pred_fallthru
    _
  %v11 = vld [vmem:[%s0] sm:$0xff]
  %v12 = vld [vmem:[%s0 + $0x8] sm:$0xff]
  %v13 = vld [vmem:[%s0 + $0x10] sm:$0xff]
  %v14 = vld [vmem:[%s0 + $0x18] sm:$0xff]
  %v15 = vld [vmem:[%s0 + $0x20] sm:$0xf]
  %v16 = vld [vmem:[%s0 + $0x28] sm:$0xf]
  %v17 = vld [vmem:[%s0 + $0x30] sm:$0xff]
  %v18 = vld [vmem:[%s0 + $0x38] sm:$0xff]
  %v19 = vld [vmem:[%s0 + $0x40] sm:$0xff]
  %v20 = vld [vmem:[%s0 + $0x48] sm:$0xff]
  %v21 = vld [vmem:[%s0 + $0x50] sm:$0xf]
  %v22 = vld [vmem:[%s0 + $0x58] sm:$0xf]
  %v23 = vld [vmem:[%s0 + $0x60] sm:$0xff]
  %v24 = vld [vmem:[%s0 + $0x68] sm:$0xff]
  %v25 = vld [vmem:[%s0 + $0x70] sm:$0xff]
  %v26 = vld [vmem:[%s0 + $0x78] sm:$0xff]
  %v27 = vld [vmem:[%s0 + $0x80] sm:$0xf]
  %v28 = vld [vmem:[%s0 + $0x88] sm:$0xf]
  %v29 = vld [vmem:[%s0 + $0x90] sm:$0xff]
  %v30 = vld [vmem:[%s0 + $0x98] sm:$0xff]
  %v31 = vld [vmem:[%s0 + $0xa0] sm:$0xff]
  %v32 = vld [vmem:[%s0 + $0xa8] sm:$0xff]
  %v33 = vld [vmem:[%s0 + $0xb0] sm:$0xf]
  %v34 = vld [vmem:[%s0 + $0xb8] sm:$0xf]
  %v35 = vld [vmem:[%s0 + $0xc0] sm:$0xff]
  %v36 = vld [vmem:[%s0 + $0xc8] sm:$0xff]
  %v37 = vld [vmem:[%s0 + $0xd0] sm:$0xff]
  %v38 = vld [vmem:[%s0 + $0xd8] sm:$0xff]
  %v39 = vld [vmem:[%s0 + $0xe0] sm:$0xf]
  %v40 = vld [vmem:[%s0 + $0xe8] sm:$0xf]
  %v41 = vld [vmem:[%s0 + $0xf0] sm:$0xff]
  %v42 = vld [vmem:[%s0 + $0xf8] sm:$0xff]
  %v43 = vld [vmem:[%s0 + $0x100] sm:$0xff]
  %v44 = vld [vmem:[%s0 + $0x108] sm:$0xff]
  %v45 = vld [vmem:[%s0 + $0x110] sm:$0xf]
  %v46 = vld [vmem:[%s0 + $0x118] sm:$0xf]
  %v47 = vld [vmem:[%s0 + $0x120] sm:$0xff]
  %v48 = vld [vmem:[%s0 + $0x128] sm:$0xff]
  %v49 = vld [vmem:[%s0 + $0x130] sm:$0xff]
  %v50 = vld [vmem:[%s0 + $0x138] sm:$0xff]
  %v51 = vld [vmem:[%s0 + $0x140] sm:$0xf]
  %v52 = vld [vmem:[%s0 + $0x148] sm:$0xf]
  %v53 = vld [vmem:[%s0 + $0x150] sm:$0xff]
  %v54 = vld [vmem:[%s0 + $0x158] sm:$0xff]
  %v55 = vld [vmem:[%s0 + $0x160] sm:$0xff]
  %v56 = vld [vmem:[%s0 + $0x168] sm:$0xff]
  %v57 = vld [vmem:[%s0 + $0x170] sm:$0xf]
  %v58 = vld [vmem:[%s0 + $0x178] sm:$0xf]
  %v59 = vld [vmem:[%s0 + $0x180] sm:$0xff]
  %v60 = vld [vmem:[%s0 + $0x188] sm:$0xff]
  %v61 = vld [vmem:[%s0 + $0x190] sm:$0xff]
  %v62 = vld [vmem:[%s0 + $0x198] sm:$0xff]
  %v63 = vld [vmem:[%s0 + $0x1a0] sm:$0xf]
  %v64 = vld [vmem:[%s0 + $0x1a8] sm:$0xf]
  %v65 = vld [vmem:[%s0 + $0x1b0] sm:$0xff]
  %v66 = vld [vmem:[%s0 + $0x1b8] sm:$0xff]
  %v67 = vld [vmem:[%s0 + $0x1c0] sm:$0xff]
  %v68 = vld [vmem:[%s0 + $0x1c8] sm:$0xff]
  %v69 = vld [vmem:[%s0 + $0x1d0] sm:$0xf]
  %v70 = vld [vmem:[%s0 + $0x1d8] sm:$0xf]
  %v71 = vld [vmem:[%s0 + $0x1e0] sm:$0xff]
  %v72 = vld [vmem:[%s0 + $0x1e8] sm:$0xff]
  %v73 = vld [vmem:[%s0 + $0x1f0] sm:$0xff]
  %v74 = vld [vmem:[%s0 + $0x1f8] sm:$0xff]
  %v75 = vld [vmem:[%s0 + $0x200] sm:$0xf]
  %v76 = vld [vmem:[%s0 + $0x208] sm:$0xf]
  %v77 = vld [vmem:[%s0 + $0x210] sm:$0xff]
  %v78 = vld [vmem:[%s0 + $0x218] sm:$0xff]
  %v79 = vld [vmem:[%s0 + $0x220] sm:$0xff]
  %v80 = vld [vmem:[%s0 + $0x228] sm:$0xff]
  %v81 = vld [vmem:[%s0 + $0x230] sm:$0xf]
  %v82 = vld [vmem:[%s0 + $0x238] sm:$0xf]
  %v83 = vld [vmem:[%s0 + $0x240] sm:$0xff]
  %v84 = vld [vmem:[%s0 + $0x248] sm:$0xff]
  %v85 = vld [vmem:[%s0 + $0x250] sm:$0xff]
  %v86 = vld [vmem:[%s0 + $0x258] sm:$0xff]
  %v87 = vld [vmem:[%s0 + $0x260] sm:$0xf]
  %v88 = vld [vmem:[%s0 + $0x268] sm:$0xf]
  %v89 = vld [vmem:[%s0 + $0x270] sm:$0xff]
  %v90 = vld [vmem:[%s0 + $0x278] sm:$0xff]
  %v91 = vld [vmem:[%s0 + $0x280] sm:$0xff]
  %v92 = vld [vmem:[%s0 + $0x288] sm:$0xff]
  %v93 = vld [vmem:[%s0 + $0x290] sm:$0xf]
  %v94 = vld [vmem:[%s0 + $0x298] sm:$0xf]
  %v95 = vld [vmem:[%s0 + $0x2a0] sm:$0xff]
  %v96 = vld [vmem:[%s0 + $0x2a8] sm:$0xff]
  %v97 = vld [vmem:[%s0 + $0x2b0] sm:$0xff]
  %v98 = vld [vmem:[%s0 + $0x2b8] sm:$0xff]
  %v99 = vld [vmem:[%s0 + $0x2c0] sm:$0xf]
  %v100 = vld [vmem:[%s0 + $0x2c8] sm:$0xf]
  %v101 = vld [vmem:[%s0 + $0x2d0] sm:$0xff]
  %v102 = vld [vmem:[%s0 + $0x2d8] sm:$0xff]
  %v103 = vld [vmem:[%s0 + $0x2e0] sm:$0xff]
  %v104 = vld [vmem:[%s0 + $0x2e8] sm:$0xff]
  %v105 = vld [vmem:[%s0 + $0x2f0] sm:$0xf]
  %v106 = vld [vmem:[%s0 + $0x2f8] sm:$0xf]
  %v107 = vld [vmem:[%s0 + $0x300] sm:$0xff]
  %v108 = vld [vmem:[%s0 + $0x308] sm:$0xff]
  %v109 = vld [vmem:[%s0 + $0x310] sm:$0xff]
  %v110 = vld [vmem:[%s0 + $0x318] sm:$0xff]
  %v111 = vld [vmem:[%s0 + $0x320] sm:$0xf]
  %v112 = vld [vmem:[%s0 + $0x328] sm:$0xf]
  %v113 = vld [vmem:[%s0 + $0x330] sm:$0xff]
  %v114 = vld [vmem:[%s0 + $0x338] sm:$0xff]
  %v115 = vld [vmem:[%s0 + $0x340] sm:$0xff]
  %v116 = vld [vmem:[%s0 + $0x348] sm:$0xff]
  %v117 = vld [vmem:[%s0 + $0x350] sm:$0xf]
  %v118 = vld [vmem:[%s0 + $0x358] sm:$0xf]
  %v119 = vld [vmem:[%s0 + $0x360] sm:$0xff]
  %v120 = vld [vmem:[%s0 + $0x368] sm:$0xff]
  %v121 = vld [vmem:[%s0 + $0x370] sm:$0xff]
  %v122 = vld [vmem:[%s0 + $0x378] sm:$0xff]
  %v123 = vld [vmem:[%s0 + $0x380] sm:$0xf]
  %v124 = vld [vmem:[%s0 + $0x388] sm:$0xf]
  %v125 = vld [vmem:[%s0 + $0x390] sm:$0xff]
  %v126 = vld [vmem:[%s0 + $0x398] sm:$0xff]
  %v127 = vld [vmem:[%s0 + $0x3a0] sm:$0xff]
  %v128 = vld [vmem:[%s0 + $0x3a8] sm:$0xff]
  %v129 = vld [vmem:[%s0 + $0x3b0] sm:$0xf]
  %v130 = vld [vmem:[%s0 + $0x3b8] sm:$0xf]
  %v131 = vld [vmem:[%s0 + $0x3c0] sm:$0xff]
  %v132 = vld [vmem:[%s0 + $0x3c8] sm:$0xff]
  %v133 = vld [vmem:[%s0 + $0x3d0] sm:$0xff]
  %v134 = vld [vmem:[%s0 + $0x3d8] sm:$0xff]
  %v135 = vld [vmem:[%s0 + $0x3e0] sm:$0xf]
  %v136 = vld [vmem:[%s0 + $0x3e8] sm:$0xf]
  %v137 = vld [vmem:[%s0 + $0x3f0] sm:$0xff]
  %v138 = vld [vmem:[%s0 + $0x3f8] sm:$0xff]
  %v139 = vld [vmem:[%s0 + $0x400] sm:$0xff]
  %v140 = vld [vmem:[%s0 + $0x408] sm:$0xff]
  %v141 = vld [vmem:[%s0 + $0x410] sm:$0xf]
  %v142 = vld [vmem:[%s0 + $0x418] sm:$0xf]
  %v143 = vld [vmem:[%s0 + $0x420] sm:$0xff]
  %v144 = vld [vmem:[%s0 + $0x428] sm:$0xff]
  %v145 = vld [vmem:[%s0 + $0x430] sm:$0xff]
  %v146 = vld [vmem:[%s0 + $0x438] sm:$0xff]
  %v147 = vld [vmem:[%s0 + $0x440] sm:$0xf]
  %v148 = vld [vmem:[%s0 + $0x448] sm:$0xf]
  %v149 = vld [vmem:[%s0 + $0x450] sm:$0xff]
  %v150 = vld [vmem:[%s0 + $0x458] sm:$0xff]
  %v151 = vld [vmem:[%s0 + $0x460] sm:$0xff]
  %v152 = vld [vmem:[%s0 + $0x468] sm:$0xff]
  %v153 = vld [vmem:[%s0 + $0x470] sm:$0xf]
  %v154 = vld [vmem:[%s0 + $0x478] sm:$0xf]
  %v155 = vld [vmem:[%s0 + $0x480] sm:$0xff]
  %v156 = vld [vmem:[%s0 + $0x488] sm:$0xff]
  %v157 = vld [vmem:[%s0 + $0x490] sm:$0xff]
  %v158 = vld [vmem:[%s0 + $0x498] sm:$0xff]
  %v159 = vld [vmem:[%s0 + $0x4a0] sm:$0xf]
  %v160 = vld [vmem:[%s0 + $0x4a8] sm:$0xf]
  %v161 = vld [vmem:[%s0 + $0x4b0] sm:$0xff]
  %v162 = vld [vmem:[%s0 + $0x4b8] sm:$0xff]
  %v163 = vld [vmem:[%s0 + $0x4c0] sm:$0xff]
  %v164 = vld [vmem:[%s0 + $0x4c8] sm:$0xff]
  %v165 = vld [vmem:[%s0 + $0x4d0] sm:$0xf]
  %v166 = vld [vmem:[%s0 + $0x4d8] sm:$0xf]
  %v167 = vld [vmem:[%s0 + $0x4e0] sm:$0xff]
  %v168 = vld [vmem:[%s0 + $0x4e8] sm:$0xff]
  %v169 = vld [vmem:[%s0 + $0x4f0] sm:$0xff]
  %v170 = vld [vmem:[%s0 + $0x4f8] sm:$0xff]
  %v171 = vld [vmem:[%s0 + $0x500] sm:$0xf]
  %v172 = vld [vmem:[%s0 + $0x508] sm:$0xf]
  %v173 = vld [vmem:[%s0 + $0x510] sm:$0xff]
  %v174 = vld [vmem:[%s0 + $0x518] sm:$0xff]
  %v175 = vld [vmem:[%s0 + $0x520] sm:$0xff]
  %v176 = vld [vmem:[%s0 + $0x528] sm:$0xff]
  %v177 = vld [vmem:[%s0 + $0x530] sm:$0xf]
  %v178 = vld [vmem:[%s0 + $0x538] sm:$0xf]
  %v179 = vld [vmem:[%s0 + $0x540] sm:$0xff]
  %v180 = vld [vmem:[%s0 + $0x548] sm:$0xff]
  %v181 = vld [vmem:[%s0 + $0x550] sm:$0xff]
  %v182 = vld [vmem:[%s0 + $0x558] sm:$0xff]
  %v183 = vld [vmem:[%s0 + $0x560] sm:$0xf]
  %v184 = vld [vmem:[%s0 + $0x568] sm:$0xf]
  %v185 = vld [vmem:[%s0 + $0x570] sm:$0xff]
  %v186 = vld [vmem:[%s0 + $0x578] sm:$0xff]
  %v187 = vld [vmem:[%s0 + $0x580] sm:$0xff]
  %v188 = vld [vmem:[%s0 + $0x588] sm:$0xff]
  %v189 = vld [vmem:[%s0 + $0x590] sm:$0xf]
  %v190 = vld [vmem:[%s0 + $0x598] sm:$0xf]
  %v191 = vld [vmem:[%s0 + $0x5a0] sm:$0xff]
  %v192 = vld [vmem:[%s0 + $0x5a8] sm:$0xff]
  %v193 = vld [vmem:[%s0 + $0x5b0] sm:$0xff]
  %v194 = vld [vmem:[%s0 + $0x5b8] sm:$0xff]
  %v195 = vld [vmem:[%s0 + $0x5c0] sm:$0xf]
  %v196 = vld [vmem:[%s0 + $0x5c8] sm:$0xf]
  %v197 = vld [vmem:[%s0 + $0x5d0] sm:$0xff]
  %v198 = vld [vmem:[%s0 + $0x5d8] sm:$0xff]
  %v199 = vld [vmem:[%s0 + $0x5e0] sm:$0xff]
  %v200 = vld [vmem:[%s0 + $0x5e8] sm:$0xff]
  %v201 = vld [vmem:[%s0 + $0x5f0] sm:$0xf]
  %v202 = vld [vmem:[%s0 + $0x5f8] sm:$0xf]
  %v203 = vld [vmem:[%s0 + $0x600] sm:$0xff]
  %v204 = vld [vmem:[%s0 + $0x608] sm:$0xff]
  %v205 = vld [vmem:[%s0 + $0x610] sm:$0xff]
  %v206 = vld [vmem:[%s0 + $0x618] sm:$0xff]
  %v207 = vld [vmem:[%s0 + $0x620] sm:$0xf]
  %v208 = vld [vmem:[%s0 + $0x628] sm:$0xf]
  %v209 = vld [vmem:[%s0 + $0x630] sm:$0xff]
  %v210 = vld [vmem:[%s0 + $0x638] sm:$0xff]
  %v211 = vld [vmem:[%s0 + $0x640] sm:$0xff]
  %v212 = vld [vmem:[%s0 + $0x648] sm:$0xff]
  %v213 = vld [vmem:[%s0 + $0x650] sm:$0xf]
  %v214 = vld [vmem:[%s0 + $0x658] sm:$0xf]
  %v215 = vld [vmem:[%s0 + $0x660] sm:$0xff]
  %v216 = vld [vmem:[%s0 + $0x668] sm:$0xff]
  %v217 = vld [vmem:[%s0 + $0x670] sm:$0xff]
  %v218 = vld [vmem:[%s0 + $0x678] sm:$0xff]
  %v219 = vld [vmem:[%s0 + $0x680] sm:$0xf]
  %v220 = vld [vmem:[%s0 + $0x688] sm:$0xf]
  %v221 = vld [vmem:[%s1] sm:$0x3]
  %v222 = vld [vmem:[%s1 + $0x2] sm:$0x3]
  %v223 = vld [vmem:[%s1 + $0x4] sm:$0x3]
  %v224 = vld [vmem:[%s1 + $0x6] sm:$0x3]
  %v225 = vld [vmem:[%s1 + $0x8] sm:$0x3]
  %v226 = vld [vmem:[%s1 + $0xa] sm:$0x3]
  %v227 = vld [vmem:[%s1 + $0xc] sm:$0x3]
  %v228 = vld [vmem:[%s1 + $0xe] sm:$0x3]
  %v229 = vld [vmem:[%s1 + $0x10] sm:$0x3]
  %v230 = vld [vmem:[%s1 + $0x12] sm:$0x3]
  %v231 = vld [vmem:[%s1 + $0x14] sm:$0x3]
  %v232 = vld [vmem:[%s1 + $0x16] sm:$0x3]
  %v233 = vld [vmem:[%s1 + $0x18] sm:$0x3]
  %v234 = vld [vmem:[%s1 + $0x1a] sm:$0x3]
  %v235 = vld [vmem:[%s1 + $0x1c] sm:$0x3]
  %v236 = vld [vmem:[%s1 + $0x1e] sm:$0x3]
  %v237 = vld [vmem:[%s1 + $0x20] sm:$0x3]
  %v238 = vld [vmem:[%s1 + $0x22] sm:$0x3]
  %v239 = vld [vmem:[%s1 + $0x24] sm:$0x3]
  %v240 = vld [vmem:[%s1 + $0x26] sm:$0x3]
  %v241 = vld [vmem:[%s1 + $0x28] sm:$0x3]
  %v242 = vld [vmem:[%s1 + $0x2a] sm:$0x3]
  %v243 = vld [vmem:[%s1 + $0x2c] sm:$0x3]
  %v244 = vld [vmem:[%s1 + $0x2e] sm:$0x3]
  %v245 = vld [vmem:[%s1 + $0x30] sm:$0x3]
  %v246 = vld [vmem:[%s1 + $0x32] sm:$0x3]
  %v247 = vld [vmem:[%s1 + $0x34] sm:$0x3]
  %v248 = vld [vmem:[%s1 + $0x36] sm:$0x3]
  %v249 = vld [vmem:[%s1 + $0x38] sm:$0x3]
  %v250 = vld [vmem:[%s1 + $0x3a] sm:$0x3]
  %v251 = vld [vmem:[%s1 + $0x3c] sm:$0x3]
  %v252 = vld [vmem:[%s1 + $0x3e] sm:$0x3]
  %v253 = vld [vmem:[%s1 + $0x40] sm:$0x3]
  %v254 = vld [vmem:[%s1 + $0x42] sm:$0x3]
  %v255 = vld [vmem:[%s1 + $0x44] sm:$0x3]
  %v291 = vperm.slane %v221, 0
  %v292 = vperm.slane %v221, 1
  %v293 = vperm.slane %v222, 0
  %v294 = vperm.slane %v222, 1
  %v295 = vperm.slane %v223, 0
  %v296 = vperm.slane %v223, 1
  %v297 = vperm.slane %v224, 0
  %v298 = vperm.slane %v224, 1
  %v299 = vperm.slane %v225, 0
  %v300 = vperm.slane %v225, 1
  %v301 = vperm.slane %v226, 0
  %v302 = vperm.slane %v226, 1
  %v303 = vperm.slane %v227, 0
  %v304 = vperm.slane %v227, 1
  %v305 = vperm.slane %v228, 0
  %v306 = vperm.slane %v228, 1
  %v307 = vperm.slane %v229, 0
  %v308 = vperm.slane %v229, 1
  %v309 = vperm.slane %v230, 0
  %v310 = vperm.slane %v230, 1
  %v311 = vperm.slane %v231, 0
  %v312 = vperm.slane %v231, 1
  %v313 = vperm.slane %v232, 0
  %v314 = vperm.slane %v232, 1
  %v315 = vperm.slane %v233, 0
  %v316 = vperm.slane %v233, 1
  %v317 = vperm.slane %v234, 0
  %v318 = vperm.slane %v234, 1
  %v319 = vperm.slane %v235, 0
  %v320 = vperm.slane %v235, 1
  %v321 = vperm.slane %v236, 0
  %v322 = vperm.slane %v236, 1
  %v323 = vperm.slane %v237, 0
  %v324 = vperm.slane %v237, 1
  %v325 = vperm.slane %v238, 0
  %v326 = vperm.slane %v238, 1
  %v327 = vperm.slane %v239, 0
  %v328 = vperm.slane %v239, 1
  %v329 = vperm.slane %v240, 0
  %v330 = vperm.slane %v240, 1
  %v331 = vperm.slane %v241, 0
  %v332 = vperm.slane %v241, 1
  %v333 = vperm.slane %v242, 0
  %v334 = vperm.slane %v242, 1
  %v335 = vperm.slane %v243, 0
  %v336 = vperm.slane %v243, 1
  %v337 = vperm.slane %v244, 0
  %v338 = vperm.slane %v244, 1
  %v339 = vperm.slane %v245, 0
  %v340 = vperm.slane %v245, 1
  %v341 = vperm.slane %v246, 0
  %v342 = vperm.slane %v246, 1
  %v343 = vperm.slane %v247, 0
  %v344 = vperm.slane %v247, 1
  %v345 = vperm.slane %v248, 0
  %v346 = vperm.slane %v248, 1
  %v347 = vperm.slane %v249, 0
  %v348 = vperm.slane %v249, 1
  %v349 = vperm.slane %v250, 0
  %v350 = vperm.slane %v250, 1
  %v351 = vperm.slane %v251, 0
  %v352 = vperm.slane %v251, 1
  %v353 = vperm.slane %v252, 0
  %v354 = vperm.slane %v252, 1
  %v355 = vperm.slane %v253, 0
  %v356 = vperm.slane %v253, 1
  %v357 = vperm.slane %v254, 0
  %v358 = vperm.slane %v254, 1
  %v359 = vperm.slane %v255, 0
  %v360 = vperm.slane %v255, 1
  %v431 = vadd.f32 %v11, %v291
  %v432 = vadd.f32 %v12, %v292
  %v433 = vadd.f32 %v13, %v291
  %v434 = vadd.f32 %v14, %v292
  %v435 = vadd.f32 %v15, %v291
  %v436 = vadd.f32 %v16, %v292
  %v437 = vadd.f32 %v17, %v293
  %v438 = vadd.f32 %v18, %v294
  %v439 = vadd.f32 %v19, %v293
  %v440 = vadd.f32 %v20, %v294
  %v441 = vadd.f32 %v21, %v293
  %v442 = vadd.f32 %v22, %v294
  %v443 = vadd.f32 %v23, %v295
  %v444 = vadd.f32 %v24, %v296
  %v445 = vadd.f32 %v25, %v295
  %v446 = vadd.f32 %v26, %v296
  %v447 = vadd.f32 %v27, %v295
  %v448 = vadd.f32 %v28, %v296
  %v449 = vadd.f32 %v29, %v297
  %v450 = vadd.f32 %v30, %v298
  %v451 = vadd.f32 %v31, %v297
  %v452 = vadd.f32 %v32, %v298
  %v453 = vadd.f32 %v33, %v297
  %v454 = vadd.f32 %v34, %v298
  %v455 = vadd.f32 %v35, %v299
  %v456 = vadd.f32 %v36, %v300
  %v457 = vadd.f32 %v37, %v299
  %v458 = vadd.f32 %v38, %v300
  %v459 = vadd.f32 %v39, %v299
  %v460 = vadd.f32 %v40, %v300
  %v461 = vadd.f32 %v41, %v301
  %v462 = vadd.f32 %v42, %v302
  %v463 = vadd.f32 %v43, %v301
  %v464 = vadd.f32 %v44, %v302
  %v465 = vadd.f32 %v45, %v301
  %v466 = vadd.f32 %v46, %v302
  %v467 = vadd.f32 %v47, %v303
  %v468 = vadd.f32 %v48, %v304
  %v469 = vadd.f32 %v49, %v303
  %v470 = vadd.f32 %v50, %v304
  %v471 = vadd.f32 %v51, %v303
  %v472 = vadd.f32 %v52, %v304
  %v473 = vadd.f32 %v53, %v305
  %v474 = vadd.f32 %v54, %v306
  %v475 = vadd.f32 %v55, %v305
  %v476 = vadd.f32 %v56, %v306
  %v477 = vadd.f32 %v57, %v305
  %v478 = vadd.f32 %v58, %v306
  %v479 = vadd.f32 %v59, %v307
  %v480 = vadd.f32 %v60, %v308
  %v481 = vadd.f32 %v61, %v307
  %v482 = vadd.f32 %v62, %v308
  %v483 = vadd.f32 %v63, %v307
  %v484 = vadd.f32 %v64, %v308
  %v485 = vadd.f32 %v65, %v309
  %v486 = vadd.f32 %v66, %v310
  %v487 = vadd.f32 %v67, %v309
  %v488 = vadd.f32 %v68, %v310
  %v489 = vadd.f32 %v69, %v309
  %v490 = vadd.f32 %v70, %v310
  %v491 = vadd.f32 %v71, %v311
  %v492 = vadd.f32 %v72, %v312
  %v493 = vadd.f32 %v73, %v311
  %v494 = vadd.f32 %v74, %v312
  %v495 = vadd.f32 %v75, %v311
  %v496 = vadd.f32 %v76, %v312
  %v497 = vadd.f32 %v77, %v313
  %v498 = vadd.f32 %v78, %v314
  %v499 = vadd.f32 %v79, %v313
  %v500 = vadd.f32 %v80, %v314
  %v501 = vadd.f32 %v81, %v313
  %v502 = vadd.f32 %v82, %v314
  %v503 = vadd.f32 %v83, %v315
  %v504 = vadd.f32 %v84, %v316
  %v505 = vadd.f32 %v85, %v315
  %v506 = vadd.f32 %v86, %v316
  %v507 = vadd.f32 %v87, %v315
  %v508 = vadd.f32 %v88, %v316
  %v509 = vadd.f32 %v89, %v317
  %v510 = vadd.f32 %v90, %v318
  %v511 = vadd.f32 %v91, %v317
  %v512 = vadd.f32 %v92, %v318
  %v513 = vadd.f32 %v93, %v317
  %v514 = vadd.f32 %v94, %v318
  %v515 = vadd.f32 %v95, %v319
  %v516 = vadd.f32 %v96, %v320
  %v517 = vadd.f32 %v97, %v319
  %v518 = vadd.f32 %v98, %v320
  %v519 = vadd.f32 %v99, %v319
  %v520 = vadd.f32 %v100, %v320
  %v521 = vadd.f32 %v101, %v321
  %v522 = vadd.f32 %v102, %v322
  %v523 = vadd.f32 %v103, %v321
  %v524 = vadd.f32 %v104, %v322
  %v525 = vadd.f32 %v105, %v321
  %v526 = vadd.f32 %v106, %v322
  %v527 = vadd.f32 %v107, %v323
  %v528 = vadd.f32 %v108, %v324
  %v529 = vadd.f32 %v109, %v323
  %v530 = vadd.f32 %v110, %v324
  %v531 = vadd.f32 %v111, %v323
  %v532 = vadd.f32 %v112, %v324
  %v533 = vadd.f32 %v113, %v325
  %v534 = vadd.f32 %v114, %v326
  %v535 = vadd.f32 %v115, %v325
  %v536 = vadd.f32 %v116, %v326
  %v537 = vadd.f32 %v117, %v325
  %v538 = vadd.f32 %v118, %v326
  %v539 = vadd.f32 %v119, %v327
  %v540 = vadd.f32 %v120, %v328
  %v541 = vadd.f32 %v121, %v327
  %v542 = vadd.f32 %v122, %v328
  %v543 = vadd.f32 %v123, %v327
  %v544 = vadd.f32 %v124, %v328
  %v545 = vadd.f32 %v125, %v329
  %v546 = vadd.f32 %v126, %v330
  %v547 = vadd.f32 %v127, %v329
  %v548 = vadd.f32 %v128, %v330
  %v549 = vadd.f32 %v129, %v329
  %v550 = vadd.f32 %v130, %v330
  %v551 = vadd.f32 %v131, %v331
  %v552 = vadd.f32 %v132, %v332
  %v553 = vadd.f32 %v133, %v331
  %v554 = vadd.f32 %v134, %v332
  %v555 = vadd.f32 %v135, %v331
  %v556 = vadd.f32 %v136, %v332
  %v557 = vadd.f32 %v137, %v333
  %v558 = vadd.f32 %v138, %v334
  %v559 = vadd.f32 %v139, %v333
  %v560 = vadd.f32 %v140, %v334
  %v561 = vadd.f32 %v141, %v333
  %v562 = vadd.f32 %v142, %v334
  %v563 = vadd.f32 %v143, %v335
  %v564 = vadd.f32 %v144, %v336
  %v565 = vadd.f32 %v145, %v335
  %v566 = vadd.f32 %v146, %v336
  %v567 = vadd.f32 %v147, %v335
  %v568 = vadd.f32 %v148, %v336
  %v569 = vadd.f32 %v149, %v337
  %v570 = vadd.f32 %v150, %v338
  %v571 = vadd.f32 %v151, %v337
  %v572 = vadd.f32 %v152, %v338
  %v573 = vadd.f32 %v153, %v337
  %v574 = vadd.f32 %v154, %v338
  %v575 = vadd.f32 %v155, %v339
  %v576 = vadd.f32 %v156, %v340
  %v577 = vadd.f32 %v157, %v339
  %v578 = vadd.f32 %v158, %v340
  %v579 = vadd.f32 %v159, %v339
  %v580 = vadd.f32 %v160, %v340
  %v581 = vadd.f32 %v161, %v341
  %v582 = vadd.f32 %v162, %v342
  %v583 = vadd.f32 %v163, %v341
  %v584 = vadd.f32 %v164, %v342
  %v585 = vadd.f32 %v165, %v341
  %v586 = vadd.f32 %v166, %v342
  %v587 = vadd.f32 %v167, %v343
  %v588 = vadd.f32 %v168, %v344
  %v589 = vadd.f32 %v169, %v343
  %v590 = vadd.f32 %v170, %v344
  %v591 = vadd.f32 %v171, %v343
  %v592 = vadd.f32 %v172, %v344
  %v593 = vadd.f32 %v173, %v345
  %v594 = vadd.f32 %v174, %v346
  %v595 = vadd.f32 %v175, %v345
  %v596 = vadd.f32 %v176, %v346
  %v597 = vadd.f32 %v177, %v345
  %v598 = vadd.f32 %v178, %v346
  %v599 = vadd.f32 %v179, %v347
  %v600 = vadd.f32 %v180, %v348
  %v601 = vadd.f32 %v181, %v347
  %v602 = vadd.f32 %v182, %v348
  %v603 = vadd.f32 %v183, %v347
  %v604 = vadd.f32 %v184, %v348
  %v605 = vadd.f32 %v185, %v349
  %v606 = vadd.f32 %v186, %v350
  %v607 = vadd.f32 %v187, %v349
  %v608 = vadd.f32 %v188, %v350
  %v609 = vadd.f32 %v189, %v349
  %v610 = vadd.f32 %v190, %v350
  %v611 = vadd.f32 %v191, %v351
  %v612 = vadd.f32 %v192, %v352
  %v613 = vadd.f32 %v193, %v351
  %v614 = vadd.f32 %v194, %v352
  %v615 = vadd.f32 %v195, %v351
  %v616 = vadd.f32 %v196, %v352
  %v617 = vadd.f32 %v197, %v353
  %v618 = vadd.f32 %v198, %v354
  %v619 = vadd.f32 %v199, %v353
  %v620 = vadd.f32 %v200, %v354
  %v621 = vadd.f32 %v201, %v353
  %v622 = vadd.f32 %v202, %v354
  %v623 = vadd.f32 %v203, %v355
  %v624 = vadd.f32 %v204, %v356
  %v625 = vadd.f32 %v205, %v355
  %v626 = vadd.f32 %v206, %v356
  %v627 = vadd.f32 %v207, %v355
  %v628 = vadd.f32 %v208, %v356
  %v629 = vadd.f32 %v209, %v357
  %v630 = vadd.f32 %v210, %v358
  %v631 = vadd.f32 %v211, %v357
  %v632 = vadd.f32 %v212, %v358
  %v633 = vadd.f32 %v213, %v357
  %v634 = vadd.f32 %v214, %v358
  %v635 = vadd.f32 %v215, %v359
  %v636 = vadd.f32 %v216, %v360
  %v637 = vadd.f32 %v217, %v359
  %v638 = vadd.f32 %v218, %v360
  %v639 = vadd.f32 %v219, %v359
  %v640 = vadd.f32 %v220, %v360
  %641 = vst [vmem:[%s2] sm:$0xff] %v431
  %vm642 = vcmask 588800
  %643 = vst.msk [vmem:[%s2 + $0x8] sm:$0xff] %vm642, %v432
  %644 = vst [vmem:[%s2 + $0x10] sm:$0xff] %v433
  %645 = vst.msk [vmem:[%s2 + $0x18] sm:$0xff] %vm642, %v434
  %646 = vst [vmem:[%s2 + $0x20] sm:$0xf] %v435
  %vm647 = vcmask 584704
  %648 = vst.msk [vmem:[%s2 + $0x28] sm:$0xf] %vm647, %v436
  %649 = vst [vmem:[%s2 + $0x30] sm:$0xff] %v437
  %650 = vst.msk [vmem:[%s2 + $0x38] sm:$0xff] %vm642, %v438
  %651 = vst [vmem:[%s2 + $0x40] sm:$0xff] %v439
  %652 = vst.msk [vmem:[%s2 + $0x48] sm:$0xff] %vm642, %v440
  %653 = vst [vmem:[%s2 + $0x50] sm:$0xf] %v441
  %654 = vst.msk [vmem:[%s2 + $0x58] sm:$0xf] %vm647, %v442
  %655 = vst [vmem:[%s2 + $0x60] sm:$0xff] %v443
  %656 = vst.msk [vmem:[%s2 + $0x68] sm:$0xff] %vm642, %v444
  %657 = vst [vmem:[%s2 + $0x70] sm:$0xff] %v445
  %658 = vst.msk [vmem:[%s2 + $0x78] sm:$0xff] %vm642, %v446
  %659 = vst [vmem:[%s2 + $0x80] sm:$0xf] %v447
  %660 = vst.msk [vmem:[%s2 + $0x88] sm:$0xf] %vm647, %v448
  %661 = vst [vmem:[%s2 + $0x90] sm:$0xff] %v449
  %662 = vst.msk [vmem:[%s2 + $0x98] sm:$0xff] %vm642, %v450
  %663 = vst [vmem:[%s2 + $0xa0] sm:$0xff] %v451
  %664 = vst.msk [vmem:[%s2 + $0xa8] sm:$0xff] %vm642, %v452
  %665 = vst [vmem:[%s2 + $0xb0] sm:$0xf] %v453
  %666 = vst.msk [vmem:[%s2 + $0xb8] sm:$0xf] %vm647, %v454
  %667 = vst [vmem:[%s2 + $0xc0] sm:$0xff] %v455
  %668 = vst.msk [vmem:[%s2 + $0xc8] sm:$0xff] %vm642, %v456
  %669 = vst [vmem:[%s2 + $0xd0] sm:$0xff] %v457
  %670 = vst.msk [vmem:[%s2 + $0xd8] sm:$0xff] %vm642, %v458
  %671 = vst [vmem:[%s2 + $0xe0] sm:$0xf] %v459
  %672 = vst.msk [vmem:[%s2 + $0xe8] sm:$0xf] %vm647, %v460
  %673 = vst [vmem:[%s2 + $0xf0] sm:$0xff] %v461
  %674 = vst.msk [vmem:[%s2 + $0xf8] sm:$0xff] %vm642, %v462
  %675 = vst [vmem:[%s2 + $0x100] sm:$0xff] %v463
  %676 = vst.msk [vmem:[%s2 + $0x108] sm:$0xff] %vm642, %v464
  %677 = vst [vmem:[%s2 + $0x110] sm:$0xf] %v465
  %678 = vst.msk [vmem:[%s2 + $0x118] sm:$0xf] %vm647, %v466
  %679 = vst [vmem:[%s2 + $0x120] sm:$0xff] %v467
  %680 = vst.msk [vmem:[%s2 + $0x128] sm:$0xff] %vm642, %v468
  %681 = vst [vmem:[%s2 + $0x130] sm:$0xff] %v469
  %682 = vst.msk [vmem:[%s2 + $0x138] sm:$0xff] %vm642, %v470
  %683 = vst [vmem:[%s2 + $0x140] sm:$0xf] %v471
  %684 = vst.msk [vmem:[%s2 + $0x148] sm:$0xf] %vm647, %v472
  %685 = vst [vmem:[%s2 + $0x150] sm:$0xff] %v473
  %686 = vst.msk [vmem:[%s2 + $0x158] sm:$0xff] %vm642, %v474
  %687 = vst [vmem:[%s2 + $0x160] sm:$0xff] %v475
  %688 = vst.msk [vmem:[%s2 + $0x168] sm:$0xff] %vm642, %v476
  %689 = vst [vmem:[%s2 + $0x170] sm:$0xf] %v477
  %690 = vst.msk [vmem:[%s2 + $0x178] sm:$0xf] %vm647, %v478
  %691 = vst [vmem:[%s2 + $0x180] sm:$0xff] %v479
  %692 = vst.msk [vmem:[%s2 + $0x188] sm:$0xff] %vm642, %v480
  %693 = vst [vmem:[%s2 + $0x190] sm:$0xff] %v481
  %694 = vst.msk [vmem:[%s2 + $0x198] sm:$0xff] %vm642, %v482
  %695 = vst [vmem:[%s2 + $0x1a0] sm:$0xf] %v483
  %696 = vst.msk [vmem:[%s2 + $0x1a8] sm:$0xf] %vm647, %v484
  %697 = vst [vmem:[%s2 + $0x1b0] sm:$0xff] %v485
  %698 = vst.msk [vmem:[%s2 + $0x1b8] sm:$0xff] %vm642, %v486
  %699 = vst [vmem:[%s2 + $0x1c0] sm:$0xff] %v487
  %700 = vst.msk [vmem:[%s2 + $0x1c8] sm:$0xff] %vm642, %v488
  %701 = vst [vmem:[%s2 + $0x1d0] sm:$0xf] %v489
  %702 = vst.msk [vmem:[%s2 + $0x1d8] sm:$0xf] %vm647, %v490
  %703 = vst [vmem:[%s2 + $0x1e0] sm:$0xff] %v491
  %704 = vst.msk [vmem:[%s2 + $0x1e8] sm:$0xff] %vm642, %v492
  %705 = vst [vmem:[%s2 + $0x1f0] sm:$0xff] %v493
  %706 = vst.msk [vmem:[%s2 + $0x1f8] sm:$0xff] %vm642, %v494
  %707 = vst [vmem:[%s2 + $0x200] sm:$0xf] %v495
  %708 = vst.msk [vmem:[%s2 + $0x208] sm:$0xf] %vm647, %v496
  %709 = vst [vmem:[%s2 + $0x210] sm:$0xff] %v497
  %710 = vst.msk [vmem:[%s2 + $0x218] sm:$0xff] %vm642, %v498
  %711 = vst [vmem:[%s2 + $0x220] sm:$0xff] %v499
  %712 = vst.msk [vmem:[%s2 + $0x228] sm:$0xff] %vm642, %v500
  %713 = vst [vmem:[%s2 + $0x230] sm:$0xf] %v501
  %714 = vst.msk [vmem:[%s2 + $0x238] sm:$0xf] %vm647, %v502
  %715 = vst [vmem:[%s2 + $0x240] sm:$0xff] %v503
  %716 = vst.msk [vmem:[%s2 + $0x248] sm:$0xff] %vm642, %v504
  %717 = vst [vmem:[%s2 + $0x250] sm:$0xff] %v505
  %718 = vst.msk [vmem:[%s2 + $0x258] sm:$0xff] %vm642, %v506
  %719 = vst [vmem:[%s2 + $0x260] sm:$0xf] %v507
  %720 = vst.msk [vmem:[%s2 + $0x268] sm:$0xf] %vm647, %v508
  %721 = vst [vmem:[%s2 + $0x270] sm:$0xff] %v509
  %722 = vst.msk [vmem:[%s2 + $0x278] sm:$0xff] %vm642, %v510
  %723 = vst [vmem:[%s2 + $0x280] sm:$0xff] %v511
  %724 = vst.msk [vmem:[%s2 + $0x288] sm:$0xff] %vm642, %v512
  %725 = vst [vmem:[%s2 + $0x290] sm:$0xf] %v513
  %726 = vst.msk [vmem:[%s2 + $0x298] sm:$0xf] %vm647, %v514
  %727 = vst [vmem:[%s2 + $0x2a0] sm:$0xff] %v515
  %728 = vst.msk [vmem:[%s2 + $0x2a8] sm:$0xff] %vm642, %v516
  %729 = vst [vmem:[%s2 + $0x2b0] sm:$0xff] %v517
  %730 = vst.msk [vmem:[%s2 + $0x2b8] sm:$0xff] %vm642, %v518
  %731 = vst [vmem:[%s2 + $0x2c0] sm:$0xf] %v519
  %732 = vst.msk [vmem:[%s2 + $0x2c8] sm:$0xf] %vm647, %v520
  %733 = vst [vmem:[%s2 + $0x2d0] sm:$0xff] %v521
  %734 = vst.msk [vmem:[%s2 + $0x2d8] sm:$0xff] %vm642, %v522
  %735 = vst [vmem:[%s2 + $0x2e0] sm:$0xff] %v523
  %736 = vst.msk [vmem:[%s2 + $0x2e8] sm:$0xff] %vm642, %v524
  %737 = vst [vmem:[%s2 + $0x2f0] sm:$0xf] %v525
  %738 = vst.msk [vmem:[%s2 + $0x2f8] sm:$0xf] %vm647, %v526
  %739 = vst [vmem:[%s2 + $0x300] sm:$0xff] %v527
  %740 = vst.msk [vmem:[%s2 + $0x308] sm:$0xff] %vm642, %v528
  %741 = vst [vmem:[%s2 + $0x310] sm:$0xff] %v529
  %742 = vst.msk [vmem:[%s2 + $0x318] sm:$0xff] %vm642, %v530
  %743 = vst [vmem:[%s2 + $0x320] sm:$0xf] %v531
  %744 = vst.msk [vmem:[%s2 + $0x328] sm:$0xf] %vm647, %v532
  %745 = vst [vmem:[%s2 + $0x330] sm:$0xff] %v533
  %746 = vst.msk [vmem:[%s2 + $0x338] sm:$0xff] %vm642, %v534
  %747 = vst [vmem:[%s2 + $0x340] sm:$0xff] %v535
  %748 = vst.msk [vmem:[%s2 + $0x348] sm:$0xff] %vm642, %v536
  %749 = vst [vmem:[%s2 + $0x350] sm:$0xf] %v537
  %750 = vst.msk [vmem:[%s2 + $0x358] sm:$0xf] %vm647, %v538
  %751 = vst [vmem:[%s2 + $0x360] sm:$0xff] %v539
  %752 = vst.msk [vmem:[%s2 + $0x368] sm:$0xff] %vm642, %v540
  %753 = vst [vmem:[%s2 + $0x370] sm:$0xff] %v541
  %754 = vst.msk [vmem:[%s2 + $0x378] sm:$0xff] %vm642, %v542
  %755 = vst [vmem:[%s2 + $0x380] sm:$0xf] %v543
  %756 = vst.msk [vmem:[%s2 + $0x388] sm:$0xf] %vm647, %v544
  %757 = vst [vmem:[%s2 + $0x390] sm:$0xff] %v545
  %758 = vst.msk [vmem:[%s2 + $0x398] sm:$0xff] %vm642, %v546
  %759 = vst [vmem:[%s2 + $0x3a0] sm:$0xff] %v547
  %760 = vst.msk [vmem:[%s2 + $0x3a8] sm:$0xff] %vm642, %v548
  %761 = vst [vmem:[%s2 + $0x3b0] sm:$0xf] %v549
  %762 = vst.msk [vmem:[%s2 + $0x3b8] sm:$0xf] %vm647, %v550
  %763 = vst [vmem:[%s2 + $0x3c0] sm:$0xff] %v551
  %764 = vst.msk [vmem:[%s2 + $0x3c8] sm:$0xff] %vm642, %v552
  %765 = vst [vmem:[%s2 + $0x3d0] sm:$0xff] %v553
  %766 = vst.msk [vmem:[%s2 + $0x3d8] sm:$0xff] %vm642, %v554
  %767 = vst [vmem:[%s2 + $0x3e0] sm:$0xf] %v555
  %768 = vst.msk [vmem:[%s2 + $0x3e8] sm:$0xf] %vm647, %v556
  %769 = vst [vmem:[%s2 + $0x3f0] sm:$0xff] %v557
  %770 = vst.msk [vmem:[%s2 + $0x3f8] sm:$0xff] %vm642, %v558
  %771 = vst [vmem:[%s2 + $0x400] sm:$0xff] %v559
  %772 = vst.msk [vmem:[%s2 + $0x408] sm:$0xff] %vm642, %v560
  %773 = vst [vmem:[%s2 + $0x410] sm:$0xf] %v561
  %774 = vst.msk [vmem:[%s2 + $0x418] sm:$0xf] %vm647, %v562
  %775 = vst [vmem:[%s2 + $0x420] sm:$0xff] %v563
  %776 = vst.msk [vmem:[%s2 + $0x428] sm:$0xff] %vm642, %v564
  %777 = vst [vmem:[%s2 + $0x430] sm:$0xff] %v565
  %778 = vst.msk [vmem:[%s2 + $0x438] sm:$0xff] %vm642, %v566
  %779 = vst [vmem:[%s2 + $0x440] sm:$0xf] %v567
  %780 = vst.msk [vmem:[%s2 + $0x448] sm:$0xf] %vm647, %v568
  %781 = vst [vmem:[%s2 + $0x450] sm:$0xff] %v569
  %782 = vst.msk [vmem:[%s2 + $0x458] sm:$0xff] %vm642, %v570
  %783 = vst [vmem:[%s2 + $0x460] sm:$0xff] %v571
  %784 = vst.msk [vmem:[%s2 + $0x468] sm:$0xff] %vm642, %v572
  %785 = vst [vmem:[%s2 + $0x470] sm:$0xf] %v573
  %786 = vst.msk [vmem:[%s2 + $0x478] sm:$0xf] %vm647, %v574
  %787 = vst [vmem:[%s2 + $0x480] sm:$0xff] %v575
  %788 = vst.msk [vmem:[%s2 + $0x488] sm:$0xff] %vm642, %v576
  %789 = vst [vmem:[%s2 + $0x490] sm:$0xff] %v577
  %790 = vst.msk [vmem:[%s2 + $0x498] sm:$0xff] %vm642, %v578
  %791 = vst [vmem:[%s2 + $0x4a0] sm:$0xf] %v579
  %792 = vst.msk [vmem:[%s2 + $0x4a8] sm:$0xf] %vm647, %v580
  %793 = vst [vmem:[%s2 + $0x4b0] sm:$0xff] %v581
  %794 = vst.msk [vmem:[%s2 + $0x4b8] sm:$0xff] %vm642, %v582
  %795 = vst [vmem:[%s2 + $0x4c0] sm:$0xff] %v583
  %796 = vst.msk [vmem:[%s2 + $0x4c8] sm:$0xff] %vm642, %v584
  %797 = vst [vmem:[%s2 + $0x4d0] sm:$0xf] %v585
  %798 = vst.msk [vmem:[%s2 + $0x4d8] sm:$0xf] %vm647, %v586
  %799 = vst [vmem:[%s2 + $0x4e0] sm:$0xff] %v587
  %800 = vst.msk [vmem:[%s2 + $0x4e8] sm:$0xff] %vm642, %v588
  %801 = vst [vmem:[%s2 + $0x4f0] sm:$0xff] %v589
  %802 = vst.msk [vmem:[%s2 + $0x4f8] sm:$0xff] %vm642, %v590
  %803 = vst [vmem:[%s2 + $0x500] sm:$0xf] %v591
  %804 = vst.msk [vmem:[%s2 + $0x508] sm:$0xf] %vm647, %v592
  %805 = vst [vmem:[%s2 + $0x510] sm:$0xff] %v593
  %806 = vst.msk [vmem:[%s2 + $0x518] sm:$0xff] %vm642, %v594
  %807 = vst [vmem:[%s2 + $0x520] sm:$0xff] %v595
  %808 = vst.msk [vmem:[%s2 + $0x528] sm:$0xff] %vm642, %v596
  %809 = vst [vmem:[%s2 + $0x530] sm:$0xf] %v597
  %810 = vst.msk [vmem:[%s2 + $0x538] sm:$0xf] %vm647, %v598
  %811 = vst [vmem:[%s2 + $0x540] sm:$0xff] %v599
  %812 = vst.msk [vmem:[%s2 + $0x548] sm:$0xff] %vm642, %v600
  %813 = vst [vmem:[%s2 + $0x550] sm:$0xff] %v601
  %814 = vst.msk [vmem:[%s2 + $0x558] sm:$0xff] %vm642, %v602
  %815 = vst [vmem:[%s2 + $0x560] sm:$0xf] %v603
  %816 = vst.msk [vmem:[%s2 + $0x568] sm:$0xf] %vm647, %v604
  %817 = vst [vmem:[%s2 + $0x570] sm:$0xff] %v605
  %818 = vst.msk [vmem:[%s2 + $0x578] sm:$0xff] %vm642, %v606
  %819 = vst [vmem:[%s2 + $0x580] sm:$0xff] %v607
  %820 = vst.msk [vmem:[%s2 + $0x588] sm:$0xff] %vm642, %v608
  %821 = vst [vmem:[%s2 + $0x590] sm:$0xf] %v609
  %822 = vst.msk [vmem:[%s2 + $0x598] sm:$0xf] %vm647, %v610
  %823 = vst [vmem:[%s2 + $0x5a0] sm:$0xff] %v611
  %824 = vst.msk [vmem:[%s2 + $0x5a8] sm:$0xff] %vm642, %v612
  %825 = vst [vmem:[%s2 + $0x5b0] sm:$0xff] %v613
  %826 = vst.msk [vmem:[%s2 + $0x5b8] sm:$0xff] %vm642, %v614
  %827 = vst [vmem:[%s2 + $0x5c0] sm:$0xf] %v615
  %828 = vst.msk [vmem:[%s2 + $0x5c8] sm:$0xf] %vm647, %v616
  %829 = vst [vmem:[%s2 + $0x5d0] sm:$0xff] %v617
  %830 = vst.msk [vmem:[%s2 + $0x5d8] sm:$0xff] %vm642, %v618
  %831 = vst [vmem:[%s2 + $0x5e0] sm:$0xff] %v619
  %832 = vst.msk [vmem:[%s2 + $0x5e8] sm:$0xff] %vm642, %v620
  %833 = vst [vmem:[%s2 + $0x5f0] sm:$0xf] %v621
  %834 = vst.msk [vmem:[%s2 + $0x5f8] sm:$0xf] %vm647, %v622
  %835 = vst [vmem:[%s2 + $0x600] sm:$0xff] %v623
  %836 = vst.msk [vmem:[%s2 + $0x608] sm:$0xff] %vm642, %v624
  %837 = vst [vmem:[%s2 + $0x610] sm:$0xff] %v625
  %838 = vst.msk [vmem:[%s2 + $0x618] sm:$0xff] %vm642, %v626
  %839 = vst [vmem:[%s2 + $0x620] sm:$0xf] %v627
  %840 = vst.msk [vmem:[%s2 + $0x628] sm:$0xf] %vm647, %v628
  %841 = vst [vmem:[%s2 + $0x630] sm:$0xff] %v629
  %842 = vst.msk [vmem:[%s2 + $0x638] sm:$0xff] %vm642, %v630
  %843 = vst [vmem:[%s2 + $0x640] sm:$0xff] %v631
  %844 = vst.msk [vmem:[%s2 + $0x648] sm:$0xff] %vm642, %v632
  %845 = vst [vmem:[%s2 + $0x650] sm:$0xf] %v633
  %846 = vst.msk [vmem:[%s2 + $0x658] sm:$0xf] %vm647, %v634
  %847 = vst [vmem:[%s2 + $0x660] sm:$0xff] %v635
  %848 = vst.msk [vmem:[%s2 + $0x668] sm:$0xff] %vm642, %v636
  %849 = vst [vmem:[%s2 + $0x670] sm:$0xff] %v637
  %850 = vst.msk [vmem:[%s2 + $0x678] sm:$0xff] %vm642, %v638
  %851 = vst [vmem:[%s2 + $0x680] sm:$0xf] %v639
  %852 = vst.msk [vmem:[%s2 + $0x688] sm:$0xf] %vm647, %v640
  // Predicated region
  $region10: #{tpu_custom_call.1} parent=0 // pred_check
    _
  $region11: #{tpu_custom_call.1} parent=0 // pred_check_branch
    %854 = sbr.rel (0) target = $region13
  $region12: #{tpu_custom_call.1} parent=0 // pred_region
    _
  $region13: #{tpu_custom_call.1} parent=0 // pred_fallthru
    _
  // Predicated region
  $region14: #{tpu_custom_call.1} parent=0 // pred_check
    _
  $region15: #{tpu_custom_call.1} parent=0 // pred_check_branch
    %856 = sbr.rel (0) target = $region17
  $region16: #{tpu_custom_call.1} parent=0 // pred_region
    _
  $region17: #{tpu_custom_call.1} parent=0 // pred_fallthru
    _

</llo_original>
